<compile_context>
chip_gen: v5e
topology: v5e:2x2
jax: 0.10.0
libtpu: 0.0.40
codegen_flags: <defaults>
</compile_context>

<pallas_src>
import functools

import jax
import jax.numpy as jnp
from jax.experimental import pallas as pl
from jax.experimental.pallas import tpu as pltpu

BN_EPS = 1e-5
LANE = 128
SUBLANE = 16   # bf16 sublane packing; also valid (stricter) for f32


def _round_up(n, m):
    return ((n + m - 1) // m) * m


def _encoder_kernel(layer_dims, out_valid, last_activation,
                    x_ref, w_ref, b_ref, out_ref):
    """Fused MLP encoder; eval-mode BatchNorm pre-folded into the next linear.

    x_ref:   (TB, input_size)      activations (bf16 or f32), feature-unpadded
    w_ref:   (L, FI_pad, FO_pad)   stacked zero-padded weights (resident)
    b_ref:   (L, FO_pad)           stacked f32 biases (resident)
    out_ref: (TB, output_size)     f32; only real lanes are stored
    layer_dims[l] = (fan_in_used, fan_out_pad) -- static slices into w_ref[l].
    """
    num_layers = len(layer_dims)
    h = x_ref[...]
    for l, (k, n) in enumerate(layer_dims):
        w = w_ref[l, :k, :n]                 # static slice of the resident stack
        b = b_ref[l:l + 1, :n]               # (1, n) f32
        # (Noisy)Linear with noise off; previous layer's BN folded into (w, b).
        # bf16 x bf16 operands in the production config, f32 MXU accumulation.
        h = jnp.dot(h, w, preferred_element_type=jnp.float32) + b
        if l < num_layers - 1:
            # Dropout (eval) = identity; ReLU on the VPU; cast back to the
            # weight dtype so the next dot stays bf16 on the MXU.
            h = jnp.maximum(h, 0.0).astype(x_ref.dtype)

    if last_activation == 'RELU':
        h = jnp.maximum(h, 0.0)
    elif last_activation == 'SOFTMAX':
        # Mask padded lanes so they do not contribute to the softmax sum.
        lane = jax.lax.broadcasted_iota(jnp.int32, h.shape, 1)
        h = jnp.where(lane < out_valid, h, -jnp.inf)
        m = jnp.max(h, axis=-1, keepdims=True)
        e = jnp.exp(h - m)
        h = e * pl.reciprocal(jnp.sum(e, axis=-1, keepdims=True), approx=True)

    out_ref[...] = h[:, :out_valid].astype(out_ref.dtype)


def pack_params(raw_params, input_size, hidden_sizes, output_size,
                weight_dtype=jnp.bfloat16):
    """Fold eval-mode BatchNorm into the next linear (in f32), zero-pad feature
    dims to a lane multiple, stack all weights into one (L, FI_pad, FO_pad)
    buffer and all biases into one (L, FO_pad) f32 buffer; cast weights last.

    raw_params layout (all f32, torch-like):
      [w, b, gamma, beta, run_mean, run_var] * len(hidden_sizes) + [w_out, b_out]
      w: (fan_in, fan_out), vectors: (1, fan_out)

    Returns (w_stack, bias_packed, layer_dims).
    """
    nh = len(hidden_sizes)
    ws, bs = [], []
    idx = 0
    scale = shift = None     # BN scale/shift of the previous layer
    for _ in range(nh):
        w, b, g, be, rm, rv = raw_params[idx:idx + 6]
        idx += 6
        w = jnp.asarray(w, jnp.float32)
        b = jnp.asarray(b, jnp.float32).reshape(1, -1)
        if scale is not None:
            b = b + shift @ w            # order matters: uses the un-scaled weight
            w = w * scale[:, None]
        ws.append(w)
        bs.append(b)
        inv = 1.0 / jnp.sqrt(jnp.asarray(rv, jnp.float32) + BN_EPS)
        a = jnp.asarray(g, jnp.float32) * inv                     # (1, fan_out)
        c = jnp.asarray(be, jnp.float32) - jnp.asarray(rm, jnp.float32) * a
        scale, shift = a.reshape(-1), c.reshape(1, -1)

    w, b = raw_params[idx], raw_params[idx + 1]
    w = jnp.asarray(w, jnp.float32)
    b = jnp.asarray(b, jnp.float32).reshape(1, -1)
    if scale is not None:
        b = b + shift @ w
        w = w * scale[:, None]
    ws.append(w)
    bs.append(b)

    num_layers = len(ws)
    fo_pads = [_round_up(wl.shape[1], LANE) for wl in ws]
    # First layer consumes the feature-unpadded input; later layers consume the
    # (lane-padded, zero-filled) previous output.
    fi_used = [ws[0].shape[0]] + fo_pads[:-1]
    fi_stack = _round_up(max(fi_used), 8)
    fo_stack = max(fo_pads)

    w_stack = jnp.zeros((num_layers, fi_stack, fo_stack), jnp.float32)
    bias_packed = jnp.zeros((num_layers, fo_stack), jnp.float32)
    layer_dims = []
    for l, (wl, bl) in enumerate(zip(ws, bs)):
        fi, fo = wl.shape
        w_stack = w_stack.at[l, :fi, :fo].set(wl)
        bias_packed = bias_packed.at[l, :fo].set(bl[0])
        layer_dims.append((fi_used[l], fo_pads[l]))
    return w_stack.astype(weight_dtype), bias_packed, tuple(layer_dims)


def encoder_forward(x, w_stack, bias_packed, layer_dims, *, output_size,
                    last_activation, batch_block=512):
    """x: (B, input_size).  w_stack/bias_packed/layer_dims: from pack_params."""
    b_raw, f_in = x.shape
    assert f_in == layer_dims[0][0], "input feature size mismatch"
    act_dtype = w_stack.dtype

    # Batch tiling:
    #  * pad the batch to a multiple of 16 rows (bf16 sublane packing),
    #  * large tiles (default 512) amortize the ~0.35 us per-grid-step cost,
    #  * but keep grid >= 2 whenever the batch allows so the "parallel" axis
    #    can be sharded across both TensorCores on v7x.
    b_min = _round_up(max(b_raw, SUBLANE), SUBLANE)
    if b_min > batch_block:
        tb = batch_block
    elif b_min >= 2 * SUBLANE:
        tb = _round_up(b_min // 2, SUBLANE)
    else:
        tb = b_min
    b_pad = _round_up(b_min, tb)

    # Only the batch dim is padded, already in the compute dtype -- no padded
    # f32 feature slab is staged through HBM.
    xp = x.astype(act_dtype)
    if b_pad != b_raw:
        xp = jnp.pad(xp, ((0, b_pad - b_raw), (0, 0)))

    kernel = functools.partial(_encoder_kernel, layer_dims, output_size,
                               last_activation)

    in_specs = [
        pl.BlockSpec((tb, f_in), lambda i: (i, 0)),            # activations
        pl.BlockSpec(w_stack.shape, lambda i: (0, 0, 0)),      # resident weights
        pl.BlockSpec(bias_packed.shape, lambda i: (0, 0)),     # resident biases
    ]

    out = pl.pallas_call(
        kernel,
        out_shape=jax.ShapeDtypeStruct((b_pad, output_size), jnp.float32),
        grid=(b_pad // tb,),
        in_specs=in_specs,
        out_specs=pl.BlockSpec((tb, output_size), lambda i: (i, 0)),
        compiler_params=pltpu.CompilerParams(
            dimension_semantics=("parallel",)),
    )(xp, w_stack, bias_packed)

    return out[:b_raw]


def init_params(key, input_size, hidden_sizes, output_size):
    """Deterministic f32 parameters mirroring the PyTorch module's shapes."""
    params = []
    sizes = [input_size] + list(hidden_sizes)
    for i in range(len(hidden_sizes)):
        fan_in, fan_out = sizes[i], sizes[i + 1]
        key, k_w, k_b, k_g, k_be, k_rm, k_rv = jax.random.split(key, 7)
        bound = 1.0 / jnp.sqrt(fan_in)
        w = jax.random.uniform(k_w, (fan_in, fan_out), jnp.float32, -bound, bound)
        b = jax.random.uniform(k_b, (1, fan_out), jnp.float32, -bound, bound)
        gamma = 1.0 + 0.1 * jax.random.normal(k_g, (1, fan_out), jnp.float32)
        beta = 0.1 * jax.random.normal(k_be, (1, fan_out), jnp.float32)
        run_mean = 0.1 * jax.random.normal(k_rm, (1, fan_out), jnp.float32)
        run_var = jnp.abs(1.0 + 0.1 * jax.random.normal(k_rv, (1, fan_out), jnp.float32))
        params += [w, b, gamma, beta, run_mean, run_var]
    fan_in = hidden_sizes[-1] if hidden_sizes else input_size
    key, k_w, k_b = jax.random.split(key, 3)
    bound = 1.0 / jnp.sqrt(fan_in)
    params.append(jax.random.uniform(k_w, (fan_in, output_size), jnp.float32, -bound, bound))
    params.append(jax.random.uniform(k_b, (1, output_size), jnp.float32, -bound, bound))
    return tuple(params)


def reference_forward(x, raw_params, num_hidden, last_activation):
    """Pure-JAX f32 reference with the original (un-folded) layer ordering."""
    h = x.astype(jnp.float32)
    idx = 0
    for _ in range(num_hidden):
        w, b, g, be, rm, rv = raw_params[idx:idx + 6]
        idx += 6
        h = jnp.maximum(h @ w + b, 0.0)
        h = (h - rm) / jnp.sqrt(rv + BN_EPS) * g + be
    w, b = raw_params[idx], raw_params[idx + 1]
    h = h @ w + b
    if last_activation == 'RELU':
        h = jnp.maximum(h, 0.0)
    elif last_activation == 'SOFTMAX':
        h = jax.nn.softmax(h, axis=-1)
    return h


if __name__ == "__main__":
    # EncoderInfo(input_size=32, output_size=16, hidden_sizes=[64, 32],
    #             last_activation='RELU', batch_norm=True, method='FC')
    input_size = 32
    output_size = 16
    hidden_sizes = [64, 32]
    last_activation = 'RELU'
    batch = 8

    key = jax.random.PRNGKey(0)
    key, kx, kp = jax.random.split(key, 3)
    x = jax.random.normal(kx, (batch, input_size), jnp.float32)
    raw = init_params(kp, input_size, hidden_sizes, output_size)

    ref = reference_forward(x, raw, len(hidden_sizes), last_activation)

    # 1) f32 weights: strict check that BN folding / padding / slicing is exact.
    w32, b32, dims32 = pack_params(raw, input_size, hidden_sizes, output_size,
                                   weight_dtype=jnp.float32)
    out32 = jax.block_until_ready(
        encoder_forward(x, w32, b32, dims32, output_size=output_size,
                        last_activation=last_activation))
    assert out32.shape == (batch, output_size)
    assert jnp.allclose(out32, ref, atol=1e-4, rtol=1e-4), "f32 mismatch vs reference"

    # 2) bf16 weights + bf16 activations (performance configuration).
    wbf, bbf, dimsbf = pack_params(raw, input_size, hidden_sizes, output_size,
                                   weight_dtype=jnp.bfloat16)
    outbf = jax.block_until_ready(
        encoder_forward(x, wbf, bbf, dimsbf, output_size=output_size,
                        last_activation=last_activation))
    assert outbf.shape == (batch, output_size)
    assert jnp.allclose(outbf, ref, atol=3e-2, rtol=3e-2), "bf16 mismatch vs reference"

    # 3) multi-tile batch (grid >= 2 + batch padding path), f32 for exactness.
    key, kx2 = jax.random.split(key)
    x2 = jax.random.normal(kx2, (300, input_size), jnp.float32)
    ref2 = reference_forward(x2, raw, len(hidden_sizes), last_activation)
    out2 = jax.block_until_ready(
        encoder_forward(x2, w32, b32, dims32, output_size=output_size,
                        last_activation=last_activation))
    assert out2.shape == (300, output_size)
    assert jnp.allclose(out2, ref2, atol=1e-3, rtol=1e-3), "multi-tile mismatch"

    print("KERNEL_OK")
</pallas_src>

<mosaic_0001>
module attributes {stable_mosaic.version = 11 : i64} {
  func.func @_encoder_kernel(%arg0: i32, %arg1: memref<16x32xf32, #tpu.memory_space<vmem>>, %arg2: memref<3x128x128xf32, #tpu.memory_space<vmem>>, %arg3: memref<3x128xf32, #tpu.memory_space<vmem>>, %arg4: memref<16x16xf32, #tpu.memory_space<vmem>>) attributes {dimension_semantics = [#tpu.dimension_semantics<parallel>], iteration_bounds = array<i64: 1>, scalar_prefetch = 0 : i64, scratch_operands = 0 : i64, tpu.core_type = #tpu.core_type<tc>, window_params = [{transform_indices = @transform_0, window_bounds = array<i64: 16, 32>}, {pipeline_mode = #tpu.pipeline_mode<synchronous>, transform_indices = @transform_1, window_bounds = array<i64: 3, 128, 128>}, {pipeline_mode = #tpu.pipeline_mode<synchronous>, transform_indices = @transform_2, window_bounds = array<i64: 3, 128>}, {transform_indices = @transform_3, window_bounds = array<i64: 16, 16>}]} {
    %c0 = arith.constant 0 : index
    %c0_0 = arith.constant 0 : index
    %0 = vector.load %arg1[%c0, %c0_0] : memref<16x32xf32, #tpu.memory_space<vmem>>, vector<16x32xf32>
    %c0_1 = arith.constant 0 : index
    %c0_2 = arith.constant 0 : index
    %c0_3 = arith.constant 0 : index
    %1 = vector.load %arg2[%c0_1, %c0_2, %c0_3] : memref<3x128x128xf32, #tpu.memory_space<vmem>>, vector<1x32x128xf32>
    %2 = vector.shape_cast %1 : vector<1x32x128xf32> to vector<32x128xf32>
    %c0_4 = arith.constant 0 : index
    %c0_5 = arith.constant 0 : index
    %3 = vector.load %arg3[%c0_4, %c0_5] : memref<3x128xf32, #tpu.memory_space<vmem>>, vector<1x128xf32>
    %cst = arith.constant dense<0.000000e+00> : vector<16x128xf32>
    %4 = tpu.matmul %0, %2, %cst {dimension_numbers = #tpu.dot_dimension_numbers<[1], [0], [0], [1], [0, 0, 1, 1], [], []>} : vector<16x32xf32>, vector<32x128xf32>, vector<16x128xf32> -> vector<16x128xf32>
    %5 = vector.broadcast %3 : vector<1x128xf32> to vector<16x128xf32>
    %6 = arith.addf %4, %5 : vector<16x128xf32>
    %cst_6 = arith.constant 0.000000e+00 : f32
    %7 = vector.broadcast %cst_6 : f32 to vector<16x128xf32>
    %8 = arith.maximumf %6, %7 : vector<16x128xf32>
    %c1 = arith.constant 1 : index
    %c0_7 = arith.constant 0 : index
    %c0_8 = arith.constant 0 : index
    %9 = vector.load %arg2[%c1, %c0_7, %c0_8] : memref<3x128x128xf32, #tpu.memory_space<vmem>>, vector<1x128x128xf32>
    %10 = vector.shape_cast %9 : vector<1x128x128xf32> to vector<128x128xf32>
    %c1_9 = arith.constant 1 : index
    %c0_10 = arith.constant 0 : index
    %11 = vector.load %arg3[%c1_9, %c0_10] : memref<3x128xf32, #tpu.memory_space<vmem>>, vector<1x128xf32>
    %cst_11 = arith.constant dense<0.000000e+00> : vector<16x128xf32>
    %12 = tpu.matmul %8, %10, %cst_11 {dimension_numbers = #tpu.dot_dimension_numbers<[1], [0], [0], [1], [0, 0, 1, 1], [], []>} : vector<16x128xf32>, vector<128x128xf32>, vector<16x128xf32> -> vector<16x128xf32>
    %13 = vector.broadcast %11 : vector<1x128xf32> to vector<16x128xf32>
    %14 = arith.addf %12, %13 : vector<16x128xf32>
    %cst_12 = arith.constant 0.000000e+00 : f32
    %15 = vector.broadcast %cst_12 : f32 to vector<16x128xf32>
    %16 = arith.maximumf %14, %15 : vector<16x128xf32>
    %c2 = arith.constant 2 : index
    %c0_13 = arith.constant 0 : index
    %c0_14 = arith.constant 0 : index
    %17 = vector.load %arg2[%c2, %c0_13, %c0_14] : memref<3x128x128xf32, #tpu.memory_space<vmem>>, vector<1x128x128xf32>
    %18 = vector.shape_cast %17 : vector<1x128x128xf32> to vector<128x128xf32>
    %c2_15 = arith.constant 2 : index
    %c0_16 = arith.constant 0 : index
    %19 = vector.load %arg3[%c2_15, %c0_16] : memref<3x128xf32, #tpu.memory_space<vmem>>, vector<1x128xf32>
    %cst_17 = arith.constant dense<0.000000e+00> : vector<16x128xf32>
    %20 = tpu.matmul %16, %18, %cst_17 {dimension_numbers = #tpu.dot_dimension_numbers<[1], [0], [0], [1], [0, 0, 1, 1], [], []>} : vector<16x128xf32>, vector<128x128xf32>, vector<16x128xf32> -> vector<16x128xf32>
    %21 = vector.broadcast %19 : vector<1x128xf32> to vector<16x128xf32>
    %22 = arith.addf %20, %21 : vector<16x128xf32>
    %cst_18 = arith.constant 0.000000e+00 : f32
    %23 = vector.broadcast %cst_18 : f32 to vector<16x128xf32>
    %24 = arith.maximumf %22, %23 : vector<16x128xf32>
    %25 = vector.extract_strided_slice %24 {offsets = [0, 0], sizes = [16, 16], strides = [1, 1]} : vector<16x128xf32> to vector<16x16xf32>
    %c0_19 = arith.constant 0 : index
    %c0_20 = arith.constant 0 : index
    %26 = vector.load %arg4[%c0_19, %c0_20] : memref<16x16xf32, #tpu.memory_space<vmem>>, vector<16x16xf32>
    tpu.vector_store %arg4[%c0_19, %c0_20], %25 {strides = array<i32>} : memref<16x16xf32, #tpu.memory_space<vmem>>, vector<16x16xf32>,
    return
  }
  func.func @transform_0(%arg0: i32) -> (i32, i32) {
    %c0_i32 = arith.constant 0 : i32
    %c0_i32_0 = arith.constant 0 : i32
    return %arg0, %c0_i32 : i32, i32
  }
  func.func @transform_1(%arg0: i32) -> (i32, i32, i32) {
    %c0_i32 = arith.constant 0 : i32
    %c0_i32_0 = arith.constant 0 : i32
    %c0_i32_1 = arith.constant 0 : i32
    %c0_i32_2 = arith.constant 0 : i32
    return %c0_i32, %c0_i32_0, %c0_i32_1 : i32, i32, i32
  }
  func.func @transform_2(%arg0: i32) -> (i32, i32) {
    %c0_i32 = arith.constant 0 : i32
    %c0_i32_0 = arith.constant 0 : i32
    %c0_i32_1 = arith.constant 0 : i32
    return %c0_i32, %c0_i32_0 : i32, i32
  }
  func.func @transform_3(%arg0: i32) -> (i32, i32) {
    %c0_i32 = arith.constant 0 : i32
    %c0_i32_0 = arith.constant 0 : i32
    return %arg0, %c0_i32 : i32, i32
  }
}

</mosaic_0001>

<llo_original>
// kernel: tpu_custom_call.1
$region0: #{tpu_custom_call.1}
  #allocation0 [shape = 'u32[]', space=smem, size = 0x4, offset = 0x4, fixed_abs, tag = 'smem constant byte address 0x4 - core index']
  #allocation1 [shape = 'u32[72,128]{1,0:T(1,128)}', space=vmem, size = 0x9000, scoped, tag = 'internal scratch']
  %s0 = inlined_call_operand.hbm [shape: f32[16,32], index: 0, kind: input, shape index: {}]
  %s1 = inlined_call_operand.hbm [shape: f32[3,128,128], index: 1, kind: input, shape index: {}]
  %s2 = inlined_call_operand.hbm [shape: f32[3,128], index: 2, kind: input, shape index: {}]
  %s3 = inlined_call_operand.hbm [shape: f32[16,16], index: 3, kind: output, shape index: {}]
  %s4 = sld [smem:[#allocation0]]
  $region34: #{tpu_custom_call.1} parent=0
    _
  %s6 = ssub.s32 1, %s4
  %s7 = scalar_select 0, %s6, %s4
  $region1: #{tpu_custom_call.1} parent=0
    #allocation2 [shape = 'u8[8192]{0}', space=vmem, size = 0x2000, scoped, tag = 'input window, operand 0, single buffered']
    #allocation3 [shape = 's32[1]{0}', space=sflag, size = 0x4, scoped, tag = 'scoped memory for tpu_custom_call.1']
    #allocation4 [shape = 's32[1]{0}', space=sflag, size = 0x4, scoped, tag = 'scoped memory for tpu_custom_call.1']
    #allocation5 [shape = 'u8[196608]{0}', space=vmem, size = 0x30000, scoped, tag = 'input window, operand 1, single buffered']
    #allocation6 [shape = 's32[1]{0}', space=sflag, size = 0x4, scoped, tag = 'scoped memory for tpu_custom_call.1']
    #allocation7 [shape = 'u8[2048]{0}', space=vmem, size = 0x800, scoped, tag = 'input window, operand 2, single buffered']
    #allocation8 [shape = 'u8[8192]{0}', space=vmem, size = 0x2000, scoped, tag = 'output window, operand 0, single buffered']
    %8 = vsyncpa [#allocation3], 0
    %9 = vsyncpa [#allocation6], 0
    %10 = vsyncpa [#allocation4], 0
    // Predicated region
    $region2: #{tpu_custom_call.1} parent=1 // pred_check
      _
    $region3: #{tpu_custom_call.1} parent=1 // pred_check_branch
      %12 = sbr.rel (0) target = $region5
    $region4: #{tpu_custom_call.1} parent=1 // pred_region
      %14 = vsyncadd [#allocation3], 0
      %s15 = sshll.u32 %s0, 4
      %s16 = int_to_ptr.hbm [resolvable:$true] %s15
      %s17 = sshll.u32 [#allocation2], 4
      %s18 = int_to_ptr.vmem [resolvable:$true] %s17
      %23 = dma.hbm_to_vmem [thread:$0]  %s16, 256, %s18, [#allocation3], 128, 128, 8
    $region5: #{tpu_custom_call.1} parent=1 // pred_fallthru
      _
    // Predicated region
    $region6: #{tpu_custom_call.1} parent=1 // pred_check
      _
    $region7: #{tpu_custom_call.1} parent=1 // pred_check_branch
      %25 = sbr.rel (0) target = $region9
    $region8: #{tpu_custom_call.1} parent=1 // pred_region
      %27 = vsyncadd [#allocation6], 0
      %s28 = sshll.u32 %s1, 4
      %s29 = int_to_ptr.hbm [resolvable:$true] %s28
      %s30 = sshll.u32 [#allocation5], 4
      %s31 = int_to_ptr.vmem [resolvable:$true] %s30
      %36 = dma.hbm_to_vmem [thread:$0]  %s29, 6144, %s31, [#allocation6], 128, 128, 8
    $region9: #{tpu_custom_call.1} parent=1 // pred_fallthru
      _
    // Predicated region
    $region10: #{tpu_custom_call.1} parent=1 // pred_check
      _
    $region11: #{tpu_custom_call.1} parent=1 // pred_check_branch
      %38 = sbr.rel (0) target = $region13
    $region12: #{tpu_custom_call.1} parent=1 // pred_region
      %40 = vsyncadd [#allocation6], 0
      %s42 = sshll.u32 %s2, 4
      %s43 = int_to_ptr.hbm [resolvable:$true] %s42
      %s44 = sshll.u32 [#allocation7], 4
      %s45 = int_to_ptr.vmem [resolvable:$true] %s44
      %47 = dma.hbm_to_vmem [thread:$0]  %s43, 64, %s45, [#allocation6]
    $region13: #{tpu_custom_call.1} parent=1 // pred_fallthru
      _
    // Predicated region
    $region14: #{tpu_custom_call.1} parent=1 // pred_check
      _
    $region15: #{tpu_custom_call.1} parent=1 // pred_check_branch
      %49 = sbr.rel (0) target = $region17
    $region16: #{tpu_custom_call.1} parent=1 // pred_region
      %51 = dma.done [#allocation3], 256
    $region17: #{tpu_custom_call.1} parent=1 // pred_fallthru
      _
    // Predicated region
    $region18: #{tpu_custom_call.1} parent=1 // pred_check
      _
    $region19: #{tpu_custom_call.1} parent=1 // pred_check_branch
      %53 = sbr.rel (0) target = $region21
    $region20: #{tpu_custom_call.1} parent=1 // pred_region
      %55 = dma.done [#allocation6], 6144
    $region21: #{tpu_custom_call.1} parent=1 // pred_fallthru
      _
    // Predicated region
    $region22: #{tpu_custom_call.1} parent=1 // pred_check
      _
    $region23: #{tpu_custom_call.1} parent=1 // pred_check_branch
      %57 = sbr.rel (0) target = $region25
    $region24: #{tpu_custom_call.1} parent=1 // pred_region
      %59 = dma.done [#allocation6], 64
    $region25: #{tpu_custom_call.1} parent=1 // pred_fallthru
      _
    %v60 = vld [vmem:[#allocation2] sm:$0xff]
    %v61 = vld [vmem:[#allocation2 + $0x8] sm:$0xff]
    %v62 = vld [vmem:[#allocation5] sm:$0xff]
    %v63 = vld [vmem:[#allocation5 + $0x8] sm:$0xff]
    %v64 = vld [vmem:[#allocation5 + $0x10] sm:$0xff]
    %v65 = vld [vmem:[#allocation5 + $0x18] sm:$0xff]
    %v66 = vld [vmem:[#allocation7] sm:$0x1]
    %v67 = vperm.slane %v66, 0
    %vm68 = vcmask 261120
    %v70 = vsel %vm68, %v60, 0
    %v73 = vsel %vm68, %v61, 0
    %75 = vmatpush.msra.mxu0 0.0
    %76 = vmatpush.msra.mxu0 0.0
    %77 = vmatpush.msra.mxu0 0.0
    %78 = vmatpush.msra.mxu0 0.0
    %79 = vmatpush.msra.mxu0 0.0
    %80 = vmatpush.msra.mxu0 0.0
    %81 = vmatpush.msra.mxu0 0.0
    %82 = vmatpush.msra.mxu0 0.0
    %83 = vmatpush.msra.mxu0 0.0
    %84 = vmatpush.msra.mxu0 0.0
    %85 = vmatpush.msra.mxu0 0.0
    %86 = vmatpush.msra.mxu0 0.0
    %87 = vmatpush.msra.mxu0 %v65
    %88 = vmatpush.msra.mxu0 %v64
    %89 = vmatpush.msra.mxu0 %v63
    %90 = vmatpush.msra.mxu0 %v62
    %91 = vmatmul.f32.gmra.mxu0 %v70
    %v92 = vpop.f32.mrf.mxu0
    %v93 = vadd.f32 %v67, %v92
    %94 = vmatmul.f32.gmra.mxu0 %v73
    %v95 = vpop.f32.mrf.mxu0
    %v96 = vadd.f32 %v67, %v95
    %97 = vdwg.mxu0
    %v98 = vmax.f32 %v93, 0.0
    %v99 = vmax.f32 %v96, 0.0
    %s100 = scalar_lea.vmem [#allocation5], 128
    %v101 = vld [vmem:[%s100] sm:$0xff]
    %v102 = vld [vmem:[%s100 + $0x8] sm:$0xff]
    %v103 = vld [vmem:[%s100 + $0x10] sm:$0xff]
    %v104 = vld [vmem:[%s100 + $0x18] sm:$0xff]
    %v105 = vld [vmem:[%s100 + $0x20] sm:$0xff]
    %v106 = vld [vmem:[%s100 + $0x28] sm:$0xff]
    %v107 = vld [vmem:[%s100 + $0x30] sm:$0xff]
    %v108 = vld [vmem:[%s100 + $0x38] sm:$0xff]
    %v109 = vld [vmem:[%s100 + $0x40] sm:$0xff]
    %v110 = vld [vmem:[%s100 + $0x48] sm:$0xff]
    %v111 = vld [vmem:[%s100 + $0x50] sm:$0xff]
    %v112 = vld [vmem:[%s100 + $0x58] sm:$0xff]
    %v113 = vld [vmem:[%s100 + $0x60] sm:$0xff]
    %v114 = vld [vmem:[%s100 + $0x68] sm:$0xff]
    %v115 = vld [vmem:[%s100 + $0x70] sm:$0xff]
    %v116 = vld [vmem:[%s100 + $0x78] sm:$0xff]
    %v117 = vld [vmem:[#allocation7 + $0x1] sm:$0x1]
    %v118 = vperm.slane %v117, 0
    %119 = vmatpush.msra.mxu0 %v116
    %120 = vmatpush.msra.mxu0 %v115
    %121 = vmatpush.msra.mxu0 %v114
    %122 = vmatpush.msra.mxu0 %v113
    %123 = vmatpush.msra.mxu0 %v112
    %124 = vmatpush.msra.mxu0 %v111
    %125 = vmatpush.msra.mxu0 %v110
    %126 = vmatpush.msra.mxu0 %v109
    %127 = vmatpush.msra.mxu0 %v108
    %128 = vmatpush.msra.mxu0 %v107
    %129 = vmatpush.msra.mxu0 %v106
    %130 = vmatpush.msra.mxu0 %v105
    %131 = vmatpush.msra.mxu0 %v104
    %132 = vmatpush.msra.mxu0 %v103
    %133 = vmatpush.msra.mxu0 %v102
    %134 = vmatpush.msra.mxu0 %v101
    %135 = vmatmul.f32.gmra.mxu0 %v98
    %v136 = vpop.f32.mrf.mxu0
    %v137 = vadd.f32 %v118, %v136
    %138 = vmatmul.f32.gmra.mxu0 %v99
    %v139 = vpop.f32.mrf.mxu0
    %v140 = vadd.f32 %v118, %v139
    %141 = vdwg.mxu0
    %v142 = vmax.f32 %v137, 0.0
    %v143 = vmax.f32 %v140, 0.0
    %s144 = scalar_lea.vmem [#allocation5], 256
    %v145 = vld [vmem:[%s144] sm:$0xff]
    %v146 = vld [vmem:[%s144 + $0x8] sm:$0xff]
    %v147 = vld [vmem:[%s144 + $0x10] sm:$0xff]
    %v148 = vld [vmem:[%s144 + $0x18] sm:$0xff]
    %v149 = vld [vmem:[%s144 + $0x20] sm:$0xff]
    %v150 = vld [vmem:[%s144 + $0x28] sm:$0xff]
    %v151 = vld [vmem:[%s144 + $0x30] sm:$0xff]
    %v152 = vld [vmem:[%s144 + $0x38] sm:$0xff]
    %v153 = vld [vmem:[%s144 + $0x40] sm:$0xff]
    %v154 = vld [vmem:[%s144 + $0x48] sm:$0xff]
    %v155 = vld [vmem:[%s144 + $0x50] sm:$0xff]
    %v156 = vld [vmem:[%s144 + $0x58] sm:$0xff]
    %v157 = vld [vmem:[%s144 + $0x60] sm:$0xff]
    %v158 = vld [vmem:[%s144 + $0x68] sm:$0xff]
    %v159 = vld [vmem:[%s144 + $0x70] sm:$0xff]
    %v160 = vld [vmem:[%s144 + $0x78] sm:$0xff]
    %v161 = vld [vmem:[#allocation7 + $0x2] sm:$0x1]
    %v162 = vperm.slane %v161, 0
    %163 = vmatpush.msra.mxu0 %v160
    %164 = vmatpush.msra.mxu0 %v159
    %165 = vmatpush.msra.mxu0 %v158
    %166 = vmatpush.msra.mxu0 %v157
    %167 = vmatpush.msra.mxu0 %v156
    %168 = vmatpush.msra.mxu0 %v155
    %169 = vmatpush.msra.mxu0 %v154
    %170 = vmatpush.msra.mxu0 %v153
    %171 = vmatpush.msra.mxu0 %v152
    %172 = vmatpush.msra.mxu0 %v151
    %173 = vmatpush.msra.mxu0 %v150
    %174 = vmatpush.msra.mxu0 %v149
    %175 = vmatpush.msra.mxu0 %v148
    %176 = vmatpush.msra.mxu0 %v147
    %177 = vmatpush.msra.mxu0 %v146
    %178 = vmatpush.msra.mxu0 %v145
    %179 = vmatmul.f32.gmra.mxu0 %v142
    %v180 = vpop.f32.mrf.mxu0
    %v181 = vadd.f32 %v162, %v180
    %182 = vmatmul.f32.gmra.mxu0 %v143
    %v183 = vpop.f32.mrf.mxu0
    %v184 = vadd.f32 %v162, %v183
    %185 = vdwg.mxu0
    %v186 = vmax.f32 %v181, 0.0
    %v187 = vmax.f32 %v184, 0.0
    %vm188 = vcmask 130048
    %189 = vst.msk [vmem:[#allocation8] sm:$0xff] %vm188, %v186
    %190 = vst.msk [vmem:[#allocation8 + $0x8] sm:$0xff] %vm188, %v187
    // Predicated region
    $region26: #{tpu_custom_call.1} parent=1 // pred_check
      _
    $region27: #{tpu_custom_call.1} parent=1 // pred_check_branch
      %192 = sbr.rel (0) target = $region29
    $region28: #{tpu_custom_call.1} parent=1 // pred_region
      %194 = vsyncadd [#allocation4], 0
      %s195 = sshll.u32 [#allocation8], 4
      %s196 = int_to_ptr.vmem [resolvable:$true] %s195
      %s197 = sshll.u32 %s3, 4
      %s198 = int_to_ptr.hbm [resolvable:$true] %s197
      %203 = dma.vmem_to_hbm [thread:$0]  %s196, 256, %s198, [#allocation4], 128, 128, 8
    $region29: #{tpu_custom_call.1} parent=1 // pred_fallthru
      _
    // Predicated region
    $region30: #{tpu_custom_call.1} parent=1 // pred_check
      _
    $region31: #{tpu_custom_call.1} parent=1 // pred_check_branch
      %205 = sbr.rel (0) target = $region33
    $region32: #{tpu_custom_call.1} parent=1 // pred_region
      %207 = dma.done [#allocation4], 256
    $region33: #{tpu_custom_call.1} parent=1 // pred_fallthru
      _
    %208 = vsyncpa [#allocation3], 1
    %209 = vsyncpa [#allocation6], 1
    %210 = vsyncpa [#allocation4], 1

</llo_original>
